<compile_context>
chip_gen: v5e
topology: v5e:2x2
jax: 0.10.0
libtpu: 0.0.40
codegen_flags: <defaults>
</compile_context>

<pallas_src>
import jax
import jax.numpy as jnp
from jax.experimental import pallas as pl
from jax.experimental.pallas import tpu as pltpu


def feat_expander_kernel(x_ref, o_ref):
    # x_ref: (tb, tf), o_ref: (n*tb, tf).
    n = o_ref.shape[0] // x_ref.shape[0]
    o_ref[...] = jnp.repeat(x_ref[...], n, axis=0)


def _vmem_budget_and_limit():
    """Double-buffered block budget + explicit scoped-VMEM limit, per chip gen."""
    cap = 64 * 1024 * 1024  # conservative default (v7x per-TC VMEM)
    try:
        info = pltpu.get_tpu_info()
        cap = int(getattr(info, "vmem_capacity_bytes", cap)) or cap
    except Exception:
        pass
    budget = min(cap // 6, 24 * 1024 * 1024)        # ~10.6 MiB v7x, ~21 MiB v5e/v6e
    limit = min(cap // 2, max(2 * budget, 32 * 1024 * 1024))
    return budget, limit


def _choose_tiles(B, F, n, itemsize, budget_bytes):
    """Pick (row_tile, feat_tile) so double-buffered in+out blocks fit the budget.

    Legality: block sublane dims must be a multiple of 8 or equal the full dim;
    lane dims a multiple of 128 or the full dim.
    """
    # Feature (lane) tile: lane-dense multiple of 128, or the full dim.
    tf = min(F, 4096) if F % 128 == 0 else F

    def ws_bytes(tb_, tf_):
        # input block + output block, x2 for double buffering.
        return 2 * (1 + n) * tb_ * tf_ * itemsize

    min_tb = B if B < 8 else 8
    # Shrink the lane tile (in multiples of 128) before forcing tiny row tiles.
    while F % 128 == 0 and tf > 128 and ws_bytes(min_tb, tf) > budget_bytes:
        tf = max(128, tf // 2)

    max_rows = budget_bytes // max(1, 2 * (1 + n) * tf * itemsize)
    if max_rows >= B:
        tb = B
    else:
        tb = min(B, max(min_tb, (max_rows // 8) * 8))
    # TODO(synk): for pathological cases (huge non-128-aligned F with huge n)
    # the minimal legal block can still exceed the budget; we rely on the
    # explicit vmem_limit_bytes headroom there.

    # v7x megacore: guarantee >= 2 grid steps along a parallel axis when the
    # problem is large enough to split, so both TensorCores get work.
    if pl.cdiv(B, tb) * pl.cdiv(F, tf) == 1:
        if B >= 16:
            tb = ((pl.cdiv(B, 2) + 7) // 8) * 8
        elif F % 128 == 0 and F >= 256:
            tf = ((pl.cdiv(F, 2) + 127) // 128) * 128
    return tb, tf


def feat_expander(x, n):
    """x: (B, F) -> (n*B, F) with out[i*n + j, :] = x[i, :]."""
    if n == 1:
        return x  # matches the PyTorch `if self.n == 1: out = x` fast path

    B, F = x.shape
    itemsize = x.dtype.itemsize
    budget, vmem_limit = _vmem_budget_and_limit()
    tb, tf = _choose_tiles(B, F, n, itemsize, budget)
    grid = (pl.cdiv(B, tb), pl.cdiv(F, tf))

    return pl.pallas_call(
        feat_expander_kernel,
        out_shape=jax.ShapeDtypeStruct((n * B, F), x.dtype),
        grid=grid,
        in_specs=[pl.BlockSpec((tb, tf), lambda i, k: (i, k))],
        out_specs=pl.BlockSpec((n * tb, tf), lambda i, k: (i, k)),
        compiler_params=pltpu.CompilerParams(
            dimension_semantics=("parallel", "parallel"),
            vmem_limit_bytes=vmem_limit,
        ),
        cost_estimate=pl.CostEstimate(
            flops=0,
            transcendentals=0,
            bytes_accessed=(1 + n) * B * F * itemsize,
        ),
    )(x)


# TODO(synk): set_n() is runtime module-state mutation in PyTorch; here `n` is
# a static Python argument to the wrapper (re-jit per n value).

if __name__ == "__main__":
    n = 4
    B, F = 4, 128

    key = jax.random.PRNGKey(0)
    x = jax.random.normal(key, (B, F), jnp.float32)

    out = jax.jit(lambda xx: feat_expander(xx, n))(x)
    out = jax.block_until_ready(out)

    assert out.shape == (n * B, F), out.shape
    ref = jnp.repeat(x, n, axis=0)  # out[i*n:(i+1)*n] = x[i]
    assert jnp.array_equal(out, ref), "mismatch vs reference row expansion"
    assert bool(jnp.all(jnp.isfinite(out)))
    print("KERNEL_OK")
</pallas_src>

<mosaic_0001>
module attributes {stable_mosaic.version = 11 : i64} {
  func.func @feat_expander_kernel(%arg0: i32, %arg1: i32, %arg2: memref<4x128xf32, #tpu.memory_space<vmem>>, %arg3: memref<16x128xf32, #tpu.memory_space<vmem>>) attributes {dimension_semantics = [#tpu.dimension_semantics<parallel>, #tpu.dimension_semantics<parallel>], iteration_bounds = array<i64: 1, 1>, scalar_prefetch = 0 : i64, scratch_operands = 0 : i64, tpu.core_type = #tpu.core_type<tc>, window_params = [{transform_indices = @transform_0, window_bounds = array<i64: 4, 128>}, {transform_indices = @transform_1, window_bounds = array<i64: 16, 128>}]} {
    %c0 = arith.constant 0 : index
    %c0_0 = arith.constant 0 : index
    %0 = vector.load %arg2[%c0, %c0_0] : memref<4x128xf32, #tpu.memory_space<vmem>>, vector<4x128xf32>
    %1 = vector.shape_cast %0 : vector<4x128xf32> to vector<4x1x128xf32>
    %2 = vector.broadcast %1 : vector<4x1x128xf32> to vector<4x4x128xf32>
    %3 = vector.shape_cast %2 : vector<4x4x128xf32> to vector<16x128xf32>
    %c0_1 = arith.constant 0 : index
    %c0_2 = arith.constant 0 : index
    %4 = vector.load %arg3[%c0_1, %c0_2] : memref<16x128xf32, #tpu.memory_space<vmem>>, vector<16x128xf32>
    tpu.vector_store %arg3[%c0_1, %c0_2], %3 {strides = array<i32>} : memref<16x128xf32, #tpu.memory_space<vmem>>, vector<16x128xf32>,
    return
  }
  func.func @transform_0(%arg0: i32, %arg1: i32) -> (i32, i32) {
    %c0_i32 = arith.constant 0 : i32
    return %arg0, %arg1 : i32, i32
  }
  func.func @transform_1(%arg0: i32, %arg1: i32) -> (i32, i32) {
    %c0_i32 = arith.constant 0 : i32
    return %arg0, %arg1 : i32, i32
  }
}

</mosaic_0001>

<llo_original>
// kernel: _lambda_.1
$region0: #{_lambda_.1}
  #allocation0 [shape = 'u32[]', space=smem, size = 0x4, offset = 0x4, fixed_abs, tag = 'smem constant byte address 0x4 - core index']
  #allocation1 [shape = 'u32[72,128]{1,0:T(1,128)}', space=vmem, size = 0x9000, scoped, tag = 'internal scratch']
  %s0 = inlined_call_operand.hbm [shape: f32[4,128], index: 0, kind: input, shape index: {}]
  %s1 = inlined_call_operand.hbm [shape: f32[16,128], index: 1, kind: output, shape index: {}]
  %s2 = sld [smem:[#allocation0]]
  $region18: #{_lambda_.1} parent=0
    _
  %s4 = ssub.s32 1, %s2
  %s5 = scalar_select 0, %s4, %s2
  $region1: #{_lambda_.1} parent=0
    #allocation2 [shape = 'u8[2048]{0}', space=vmem, size = 0x800, scoped, tag = 'input window, operand 0, single buffered']
    #allocation3 [shape = 's32[1]{0}', space=sflag, size = 0x4, scoped, tag = 'scoped memory for _lambda_.1']
    #allocation4 [shape = 's32[1]{0}', space=sflag, size = 0x4, scoped, tag = 'scoped memory for _lambda_.1']
    #allocation5 [shape = 'u8[8192]{0}', space=vmem, size = 0x2000, scoped, tag = 'output window, operand 0, single buffered']
    %6 = vsyncpa [#allocation3], 0
    %7 = vsyncpa [#allocation4], 0
    // Predicated region
    $region2: #{_lambda_.1} parent=1 // pred_check
      _
    $region3: #{_lambda_.1} parent=1 // pred_check_branch
      %9 = sbr.rel (0) target = $region5
    $region4: #{_lambda_.1} parent=1 // pred_region
      %11 = vsyncadd [#allocation3], 0
      %s13 = sshll.u32 %s0, 4
      %s14 = int_to_ptr.hbm [resolvable:$true] %s13
      %s15 = sshll.u32 [#allocation2], 4
      %s16 = int_to_ptr.vmem [resolvable:$true] %s15
      %18 = dma.hbm_to_vmem [thread:$0]  %s14, 64, %s16, [#allocation3]
    $region5: #{_lambda_.1} parent=1 // pred_fallthru
      _
    // Predicated region
    $region6: #{_lambda_.1} parent=1 // pred_check
      _
    $region7: #{_lambda_.1} parent=1 // pred_check_branch
      %20 = sbr.rel (0) target = $region9
    $region8: #{_lambda_.1} parent=1 // pred_region
      %22 = dma.done [#allocation3], 64
    $region9: #{_lambda_.1} parent=1 // pred_fallthru
      _
    %v23 = vld [vmem:[#allocation2] sm:$0xf]
    %v25 = vrot.slane %v23, 1
    %v26 = vrot.slane %v23, 2
    %v27 = vrot.slane %v23, 3
    %v28 = vperm.slane %v23, 0
    %v29 = vperm.slane %v25, 0
    %v30 = vperm.slane %v26, 0
    %v31 = vperm.slane %v27, 0
    %32 = vst [vmem:[#allocation1] ss:$2 sm:$0xff] %v28
    %s33 = scalar_lea.vmem [#allocation1], 1
    %34 = vst [vmem:[%s33] ss:$2 sm:$0xff] %v29
    %s35 = scalar_lea.vmem [#allocation1], 16
    %36 = vst [vmem:[%s35] ss:$2 sm:$0xff] %v30
    %s37 = scalar_lea.vmem [#allocation1], 17
    %38 = vst [vmem:[%s37] ss:$2 sm:$0xff] %v31
    %v39 = vld.sshfl [vmem:[#allocation1] sm:$0xff pattern:$0x75316420]
    %v40 = vld.sshfl [vmem:[#allocation1 + $0x10] sm:$0xff pattern:$0x75316420]
    %43 = vst [vmem:[#allocation5] sm:$0xff] %v39
    %44 = vst [vmem:[#allocation5 + $0x8] sm:$0xff] %v40
    // Predicated region
    $region10: #{_lambda_.1} parent=1 // pred_check
      _
    $region11: #{_lambda_.1} parent=1 // pred_check_branch
      %46 = sbr.rel (0) target = $region13
    $region12: #{_lambda_.1} parent=1 // pred_region
      %48 = vsyncadd [#allocation4], 0
      %s49 = sshll.u32 [#allocation5], 4
      %s50 = int_to_ptr.vmem [resolvable:$true] %s49
      %s51 = sshll.u32 %s1, 4
      %s52 = int_to_ptr.hbm [resolvable:$true] %s51
      %57 = dma.vmem_to_hbm [thread:$0]  %s50, 256, %s52, [#allocation4], 128, 128, 8
    $region13: #{_lambda_.1} parent=1 // pred_fallthru
      _
    // Predicated region
    $region14: #{_lambda_.1} parent=1 // pred_check
      _
    $region15: #{_lambda_.1} parent=1 // pred_check_branch
      %59 = sbr.rel (0) target = $region17
    $region16: #{_lambda_.1} parent=1 // pred_region
      %61 = dma.done [#allocation4], 256
    $region17: #{_lambda_.1} parent=1 // pred_fallthru
      _
    %62 = vsyncpa [#allocation3], 1
    %63 = vsyncpa [#allocation4], 1

</llo_original>
